<compile_context>
chip_gen: v5e
topology: v5e:2x2
jax: 0.10.0
libtpu: 0.0.40
codegen_flags: <defaults>
</compile_context>

<pallas_src>
import math
from functools import partial

import numpy as np
import jax
import jax.numpy as jnp
from jax.experimental import pallas as pl
from jax.experimental.pallas import tpu as pltpu

LANE = 128
MAX_BLOCK_ROWS = 512           # 512 rows x 128 lanes = 64K vertices per grid step
MIN_PAD = 8 * LANE             # 1024: smallest dense (8,128) planar buffer


def _round_up(x, m):
    return ((x + m - 1) // m) * m


def _padded_size(ntot):
    """Bucketed padded vertex count (limits recompiles across mesh sizes)."""
    block_cols = MAX_BLOCK_ROWS * LANE
    if ntot <= block_cols:
        npad = max(MIN_PAD, 1 << max(0, int(ntot - 1).bit_length()))
        return npad, npad                      # single block, no pipeline steps
    return _round_up(ntot, block_cols), block_cols


# --------------------------------------------------------------------------- #
# Fused Pallas kernel: camera transform + hair displacement + depth texture
# --------------------------------------------------------------------------- #
def _render_depth_kernel(params_ref, meta_ref, v_ref, vout_ref, depth_ref,
                         *, block_rows):
    """
    params_ref : SMEM (13,) f32  [m00..m22, t0, t1, t2, dis]
    meta_ref   : SMEM (1,)  i32  [nh]  (raw hair-vertex count)
    v_ref      : VMEM (3, block_rows, 128) f32  coordinate planes; vertex
                 columns laid out as [hair | hair (displaced copy) | body | pad]
    vout_ref   : VMEM (3, block_rows, 128) f32  transformed vertices (z negated)
    depth_ref  : VMEM (block_rows, 128)    f32  (z+1)/2, single channel
    """
    nh = meta_ref[0]
    dis = params_ref[12]

    # Global vertex index of every element in this tile (vertex = row*128+lane).
    base = pl.program_id(0) * (block_rows * LANE)
    row = jax.lax.broadcasted_iota(jnp.int32, (block_rows, LANE), 0)
    lane = jax.lax.broadcasted_iota(jnp.int32, (block_rows, LANE), 1)
    col = base + row * LANE + lane

    # torch process_hair_vertices applied to a (1, N, 3) tensor:
    #   copy region = vertices [nh, 2nh)
    #   vertex nh+2 : copy is reset to the undisplaced value (all coords)
    #   vertex nh   : per-coordinate, coord < 0 -> coord - dis else coord + dis
    in_copy = (col >= nh) & (col < 2 * nh)
    add_dis = in_copy & (col != nh + 2)
    is_v0 = col == nh
    # TODO(synk): displacement masks could be pl.when-gated on tiles that cannot
    # intersect [nh, 2nh); skipped because the kernel stays HBM-bound.

    x = v_ref[0]
    y = v_ref[1]
    z = v_ref[2]

    m = [params_ref[i] for i in range(9)]
    t = [params_ref[9 + i] for i in range(3)]

    def transform(r):      # affine camera transform: pure VPU FMAs, MXU idle
        return m[3 * r] * x + m[3 * r + 1] * y + m[3 * r + 2] * z + t[r]

    def displace(u):       # column-parallel process_hair_vertices semantics
        u_shift = jnp.where(is_v0 & (u < 0.0), u - dis, u + dis)
        return jnp.where(add_dis, u_shift, u)

    fx = displace(transform(0))
    fy = displace(transform(1))
    fz = displace(transform(2))

    vout_ref[0] = fx
    vout_ref[1] = fy
    vout_ref[2] = -fz
    depth_ref[...] = (fz + 1.0) * 0.5          # depth uses z BEFORE negation


def _pallas_forward(planes, params, meta):
    _, nrows, _ = planes.shape
    block_rows = nrows if nrows <= MAX_BLOCK_ROWS else MAX_BLOCK_ROWS
    grid = (nrows // block_rows,)
    kernel = partial(_render_depth_kernel, block_rows=block_rows)
    return pl.pallas_call(
        kernel,
        out_shape=(jax.ShapeDtypeStruct((3, nrows, LANE), jnp.float32),
                   jax.ShapeDtypeStruct((nrows, LANE), jnp.float32)),
        grid=grid,
        in_specs=[
            pl.BlockSpec(memory_space=pltpu.MemorySpace.SMEM),   # camera + dis
            pl.BlockSpec(memory_space=pltpu.MemorySpace.SMEM),   # [nh]
            pl.BlockSpec((3, block_rows, LANE), lambda i: (0, i, 0)),
        ],
        out_specs=(
            pl.BlockSpec((3, block_rows, LANE), lambda i: (0, i, 0)),
            pl.BlockSpec((block_rows, LANE), lambda i: (i, 0)),
        ),
        compiler_params=pltpu.CompilerParams(
            dimension_semantics=("parallel",)),   # independent tiles; 2 TCs on v7x
    )(params, meta, planes)


_forward_planar = jax.jit(_pallas_forward)


@partial(jax.jit, static_argnames=("ntot",))
def _forward_vertex_major(planes, params, meta, *, ntot):
    vout, depth = _pallas_forward(planes, params, meta)
    verts = vout.reshape(3, -1)[:, :ntot].T[None]                         # (1, N, 3)
    tex = jnp.broadcast_to(depth.reshape(-1)[:ntot][None, :, None], (1, ntot, 3))
    return verts, tex


# --------------------------------------------------------------------------- #
# Wrapper (init-time prep + per-frame forward)
# --------------------------------------------------------------------------- #
def prepare_render_depth(hair_raw, body_raw, calib, dis=0.001):
    """One-time setup (mirrors RenderDepth.__init__ mesh/camera loading).

    Builds the coordinate-planar, lane/sublane-dense, padded vertex buffer in
    the OUTPUT column order [hair | hair (displaced copy) | body | pad] plus
    the 13 camera/dis coefficients.  This layout plumbing runs once per
    mesh+camera, never on the per-frame forward path.
    """
    hair = np.asarray(hair_raw, np.float32)
    body = np.asarray(body_raw, np.float32)
    nh, nb = hair.shape[0], body.shape[0]
    ntot = 2 * nh + nb
    npad, _ = _padded_size(ntot)

    planes = np.zeros((3, npad), np.float32)
    # TODO(synk): the duplicated hair columns could be removed by remapping the
    # copy-region output tiles back onto the hair input tiles in the index_map
    # once nh is padded to a tile multiple; kept duplicated here since this
    # buffer is built only once at init time.
    planes[:, :nh] = hair.T
    planes[:, nh:2 * nh] = hair.T
    planes[:, 2 * nh:ntot] = body.T
    planes = planes.reshape(3, npad // LANE, LANE)

    cam = np.asarray(calib, np.float32)
    params = np.concatenate(
        [cam[:3, :3].reshape(9), cam[:3, 3], np.array([dis], np.float32)]
    ).astype(np.float32)
    meta = np.array([nh], np.int32)
    return {
        "planes": jnp.asarray(planes),
        "params": jnp.asarray(params),
        "meta": jnp.asarray(meta),
        "ntot": ntot,
    }


def render_depth_forward(state, faces, vertex_major=True):
    """Mirrors RenderDepth.forward(); returns (vertices, faces, textures).

    vertex_major=True  -> spec layout: vertices (1, N, 3), textures (1, N, 3).
    vertex_major=False -> kernel-native layout: vertices as coordinate planes
                          (3, npad//128, 128) and a single-channel depth plane
                          (npad//128, 128); preferred for large N (no extra
                          HBM transpose pass, no replicated depth channels).
    """
    if vertex_major:
        verts, tex = _forward_vertex_major(
            state["planes"], state["params"], state["meta"], ntot=state["ntot"])
        # TODO(synk): Mesh(vertices, faces, textures, 1, 'vertex') is an
        # external renderer object; we return its constructor arguments.
        return verts, faces, tex
    vplanes, depth = _forward_planar(state["planes"], state["params"], state["meta"])
    return vplanes, faces, depth


# --------------------------------------------------------------------------- #
# Glue: synthetic geometry / camera (replaces file loads) + numpy reference
# --------------------------------------------------------------------------- #
def euler_to_rot_mat(r_x, r_y, r_z):
    R_x = np.array([[1, 0, 0],
                    [0, math.cos(r_x), -math.sin(r_x)],
                    [0, math.sin(r_x), math.cos(r_x)]])
    R_y = np.array([[math.cos(r_y), 0, math.sin(r_y)],
                    [0, 1, 0],
                    [-math.sin(r_y), 0, math.cos(r_y)]])
    R_z = np.array([[math.cos(r_z), -math.sin(r_z), 0],
                    [math.sin(r_z), math.cos(r_z), 0],
                    [0, 0, 1]])
    return R_z @ R_y @ R_x


def make_calib(load_size=1024):
    # Deterministic synthetic camera params (instead of np.load of camera_path)
    ortho_ratio = 0.4
    scale = 180.0
    center = np.array([0.0, 0.6, 0.0])
    R = euler_to_rot_mat(0.0, math.radians(10.0), math.radians(5.0))
    translate = -np.matmul(R, center).reshape(3, 1)
    extrinsic = np.concatenate([R, translate], axis=1)
    extrinsic = np.concatenate([extrinsic, np.array([[0.0, 0.0, 0.0, 1.0]])], 0)
    scale_intrinsic = np.identity(4)
    scale_intrinsic[0, 0] = scale / ortho_ratio
    scale_intrinsic[1, 1] = -scale / ortho_ratio
    scale_intrinsic[2, 2] = scale / ortho_ratio
    uv_intrinsic = np.identity(4)
    for i in range(3):
        uv_intrinsic[i, i] = 1.0 / float(load_size // 2)
    intrinsic = np.matmul(np.identity(4), np.matmul(uv_intrinsic, scale_intrinsic))
    return np.matmul(intrinsic, extrinsic).astype(np.float32)       # (4, 4)


def build_faces(hair_lines, body_faces, num_hair_raw):
    # Mirrors load_hair_raw + combine_faces
    L = hair_lines.shape[0]
    hair_faces = np.zeros((2 * L, 3), np.int64)
    hair_faces[:L, :2] = hair_lines
    hair_faces[:L, 2] = hair_lines[:, 1] + num_hair_raw
    hair_faces[L:, :2] = hair_lines + num_hair_raw
    hair_faces[L:, 2] = hair_lines[:, 0]
    num_hairV = num_hair_raw * 2
    faces = np.concatenate([hair_faces, body_faces + num_hairV], axis=0)
    return faces[None].astype(np.int32)


def reference_forward(hair_raw, body_raw, calib, dis=0.001):
    # Plain numpy replication of RenderDepth.forward (for sanity checking).
    # Matches the torch code, which indexes process_hair_vertices on the
    # (1, N, 3) tensor -> vertex #2 reset / vertex #0 fix-up (per coordinate).
    mat, trans = calib[:3, :3], calib[:3, 3]
    hair_uv = (hair_raw[:, None, :] * mat[None, :, :]).sum(-1) + trans
    body_uv = (body_raw[:, None, :] * mat[None, :, :]).sum(-1) + trans
    h_dis = hair_uv + dis
    h_dis[2] = hair_uv[2]
    v0 = hair_uv[0]
    h_dis[0] = np.where(v0 < 0, h_dis[0] - 2 * dis, h_dis[0])
    hair_full = np.concatenate([hair_uv, h_dis], axis=0)
    verts = np.concatenate([hair_full, body_uv], axis=0)
    tex = np.repeat((verts[:, 2:3] + 1.0) * 0.5, 3, axis=1)
    verts = verts.copy()
    verts[:, 2] = -verts[:, 2]
    return verts[None].astype(np.float32), tex[None].astype(np.float32)


# --------------------------------------------------------------------------- #
if __name__ == "__main__":
    key = jax.random.PRNGKey(0)
    k1, k2 = jax.random.split(key)

    # Synthetic geometry (replaces trimesh / open3d file loads)
    n_strands, pts_per_strand = 8, 12
    nh = n_strands * pts_per_strand        # 96 raw hair vertices
    nb = 64                                # body vertices

    hair_raw = jax.random.normal(k1, (nh, 3), jnp.float32) * 0.3
    body_raw = jax.random.normal(k2, (nb, 3), jnp.float32) * 0.3

    lines = []
    for s in range(n_strands):
        base = s * pts_per_strand
        for p in range(pts_per_strand - 1):
            lines.append((base + p, base + p + 1))
    hair_lines = np.asarray(lines, dtype=np.int64)                   # (88, 2)

    rng = np.random.RandomState(0)
    body_faces = rng.randint(0, nb, size=(96, 3)).astype(np.int64)

    faces = jnp.asarray(build_faces(hair_lines, body_faces, nh))     # (1, 272, 3)
    calib = make_calib()                                             # (4, 4)
    # world_to_view_point with deg=0 is identity and is never used in forward().

    state = prepare_render_depth(hair_raw, body_raw, calib, dis=0.001)

    vertices, faces_out, textures = render_depth_forward(state, faces,
                                                         vertex_major=True)
    vplanes, _, depth_plane = render_depth_forward(state, faces,
                                                   vertex_major=False)
    jax.block_until_ready((vertices, textures, faces_out, vplanes, depth_plane))

    ref_v, ref_t = reference_forward(
        np.asarray(hair_raw), np.asarray(body_raw), np.asarray(calib), dis=0.001)
    ntot = 2 * nh + nb
    assert vertices.shape == (1, ntot, 3)
    assert textures.shape == (1, ntot, 3)
    assert np.allclose(np.asarray(vertices), ref_v, atol=1e-3, rtol=1e-3)
    assert np.allclose(np.asarray(textures), ref_t, atol=1e-3, rtol=1e-3)
    # kernel-native planar outputs carry the same values
    assert np.allclose(np.asarray(vplanes).reshape(3, -1)[:, :ntot].T, ref_v[0],
                       atol=1e-3, rtol=1e-3)
    assert np.allclose(np.asarray(depth_plane).reshape(-1)[:ntot], ref_t[0, :, 0],
                       atol=1e-3, rtol=1e-3)

    print("KERNEL_OK")
</pallas_src>

<mosaic_0001>
module attributes {stable_mosaic.version = 11 : i64} {
  func.func @_render_depth_kernel(%arg0: i32, %arg1: memref<13xf32, #tpu.memory_space<smem>>, %arg2: memref<1xi32, #tpu.memory_space<smem>>, %arg3: memref<3x8x128xf32, #tpu.memory_space<vmem>>, %arg4: memref<3x8x128xf32, #tpu.memory_space<vmem>>, %arg5: memref<8x128xf32, #tpu.memory_space<vmem>>) attributes {dimension_semantics = [#tpu.dimension_semantics<parallel>], iteration_bounds = array<i64: 1>, scalar_prefetch = 0 : i64, scratch_operands = 0 : i64, tpu.core_type = #tpu.core_type<tc>, window_params = [{transform_indices = @transform_0, window_bounds = array<i64: 13>}, {transform_indices = @transform_1, window_bounds = array<i64: 1>}, {transform_indices = @transform_2, window_bounds = array<i64: 3, 8, 128>}, {transform_indices = @transform_3, window_bounds = array<i64: 3, 8, 128>}, {transform_indices = @transform_4, window_bounds = array<i64: 8, 128>}]} {
    %c0 = arith.constant 0 : index
    %0 = memref.load %arg2[%c0] : memref<1xi32, #tpu.memory_space<smem>>
    %c12 = arith.constant 12 : index
    %1 = memref.load %arg1[%c12] : memref<13xf32, #tpu.memory_space<smem>>
    %c1024_i32 = arith.constant 1024 : i32
    %2 = arith.muli %arg0, %c1024_i32 : i32
    %3 = tpu.iota {dimensions = array<i32: 0>} : vector<8x128xi32>
    %4 = tpu.iota {dimensions = array<i32: 1>} : vector<8x128xi32>
    %c128_i32 = arith.constant 128 : i32
    %5 = vector.broadcast %c128_i32 : i32 to vector<8x128xi32>
    %6 = arith.muli %3, %5 : vector<8x128xi32>
    %7 = vector.broadcast %2 : i32 to vector<8x128xi32>
    %8 = arith.addi %7, %6 : vector<8x128xi32>
    %9 = arith.addi %8, %4 : vector<8x128xi32>
    %10 = vector.broadcast %0 : i32 to vector<8x128xi32>
    %11 = arith.cmpi sge, %9, %10 : vector<8x128xi32>
    %c2_i32 = arith.constant 2 : i32
    %12 = arith.muli %c2_i32, %0 : i32
    %13 = vector.broadcast %12 : i32 to vector<8x128xi32>
    %14 = arith.cmpi slt, %9, %13 : vector<8x128xi32>
    %15 = arith.andi %11, %14 : vector<8x128xi1>
    %c2_i32_0 = arith.constant 2 : i32
    %16 = arith.addi %0, %c2_i32_0 : i32
    %17 = vector.broadcast %16 : i32 to vector<8x128xi32>
    %18 = arith.cmpi ne, %9, %17 : vector<8x128xi32>
    %19 = arith.andi %15, %18 : vector<8x128xi1>
    %20 = vector.broadcast %0 : i32 to vector<8x128xi32>
    %21 = arith.cmpi eq, %9, %20 : vector<8x128xi32>
    %c0_1 = arith.constant 0 : index
    %c0_2 = arith.constant 0 : index
    %c0_3 = arith.constant 0 : index
    %22 = vector.load %arg3[%c0_1, %c0_2, %c0_3] : memref<3x8x128xf32, #tpu.memory_space<vmem>>, vector<1x8x128xf32>
    %23 = vector.shape_cast %22 : vector<1x8x128xf32> to vector<8x128xf32>
    %c1 = arith.constant 1 : index
    %c0_4 = arith.constant 0 : index
    %c0_5 = arith.constant 0 : index
    %24 = vector.load %arg3[%c1, %c0_4, %c0_5] : memref<3x8x128xf32, #tpu.memory_space<vmem>>, vector<1x8x128xf32>
    %25 = vector.shape_cast %24 : vector<1x8x128xf32> to vector<8x128xf32>
    %c2 = arith.constant 2 : index
    %c0_6 = arith.constant 0 : index
    %c0_7 = arith.constant 0 : index
    %26 = vector.load %arg3[%c2, %c0_6, %c0_7] : memref<3x8x128xf32, #tpu.memory_space<vmem>>, vector<1x8x128xf32>
    %27 = vector.shape_cast %26 : vector<1x8x128xf32> to vector<8x128xf32>
    %c0_8 = arith.constant 0 : index
    %28 = memref.load %arg1[%c0_8] : memref<13xf32, #tpu.memory_space<smem>>
    %c1_9 = arith.constant 1 : index
    %29 = memref.load %arg1[%c1_9] : memref<13xf32, #tpu.memory_space<smem>>
    %c2_10 = arith.constant 2 : index
    %30 = memref.load %arg1[%c2_10] : memref<13xf32, #tpu.memory_space<smem>>
    %c3 = arith.constant 3 : index
    %31 = memref.load %arg1[%c3] : memref<13xf32, #tpu.memory_space<smem>>
    %c4 = arith.constant 4 : index
    %32 = memref.load %arg1[%c4] : memref<13xf32, #tpu.memory_space<smem>>
    %c5 = arith.constant 5 : index
    %33 = memref.load %arg1[%c5] : memref<13xf32, #tpu.memory_space<smem>>
    %c6 = arith.constant 6 : index
    %34 = memref.load %arg1[%c6] : memref<13xf32, #tpu.memory_space<smem>>
    %c7 = arith.constant 7 : index
    %35 = memref.load %arg1[%c7] : memref<13xf32, #tpu.memory_space<smem>>
    %c8 = arith.constant 8 : index
    %36 = memref.load %arg1[%c8] : memref<13xf32, #tpu.memory_space<smem>>
    %c9 = arith.constant 9 : index
    %37 = memref.load %arg1[%c9] : memref<13xf32, #tpu.memory_space<smem>>
    %c10 = arith.constant 10 : index
    %38 = memref.load %arg1[%c10] : memref<13xf32, #tpu.memory_space<smem>>
    %c11 = arith.constant 11 : index
    %39 = memref.load %arg1[%c11] : memref<13xf32, #tpu.memory_space<smem>>
    %40 = vector.broadcast %28 : f32 to vector<8x128xf32>
    %41 = arith.mulf %40, %23 : vector<8x128xf32>
    %42 = vector.broadcast %29 : f32 to vector<8x128xf32>
    %43 = arith.mulf %42, %25 : vector<8x128xf32>
    %44 = arith.addf %41, %43 : vector<8x128xf32>
    %45 = vector.broadcast %30 : f32 to vector<8x128xf32>
    %46 = arith.mulf %45, %27 : vector<8x128xf32>
    %47 = arith.addf %44, %46 : vector<8x128xf32>
    %48 = vector.broadcast %37 : f32 to vector<8x128xf32>
    %49 = arith.addf %47, %48 : vector<8x128xf32>
    %cst = arith.constant 0.000000e+00 : f32
    %50 = vector.broadcast %cst : f32 to vector<8x128xf32>
    %51 = arith.cmpf olt, %49, %50 : vector<8x128xf32>
    %52 = arith.andi %21, %51 : vector<8x128xi1>
    %53 = vector.broadcast %1 : f32 to vector<8x128xf32>
    %54 = arith.subf %49, %53 : vector<8x128xf32>
    %55 = vector.broadcast %1 : f32 to vector<8x128xf32>
    %56 = arith.addf %49, %55 : vector<8x128xf32>
    %57 = arith.select %52, %54, %56 : vector<8x128xi1>, vector<8x128xf32>
    %58 = arith.select %19, %57, %49 : vector<8x128xi1>, vector<8x128xf32>
    %59 = vector.broadcast %31 : f32 to vector<8x128xf32>
    %60 = arith.mulf %59, %23 : vector<8x128xf32>
    %61 = vector.broadcast %32 : f32 to vector<8x128xf32>
    %62 = arith.mulf %61, %25 : vector<8x128xf32>
    %63 = arith.addf %60, %62 : vector<8x128xf32>
    %64 = vector.broadcast %33 : f32 to vector<8x128xf32>
    %65 = arith.mulf %64, %27 : vector<8x128xf32>
    %66 = arith.addf %63, %65 : vector<8x128xf32>
    %67 = vector.broadcast %38 : f32 to vector<8x128xf32>
    %68 = arith.addf %66, %67 : vector<8x128xf32>
    %cst_11 = arith.constant 0.000000e+00 : f32
    %69 = vector.broadcast %cst_11 : f32 to vector<8x128xf32>
    %70 = arith.cmpf olt, %68, %69 : vector<8x128xf32>
    %71 = arith.andi %21, %70 : vector<8x128xi1>
    %72 = vector.broadcast %1 : f32 to vector<8x128xf32>
    %73 = arith.subf %68, %72 : vector<8x128xf32>
    %74 = vector.broadcast %1 : f32 to vector<8x128xf32>
    %75 = arith.addf %68, %74 : vector<8x128xf32>
    %76 = arith.select %71, %73, %75 : vector<8x128xi1>, vector<8x128xf32>
    %77 = arith.select %19, %76, %68 : vector<8x128xi1>, vector<8x128xf32>
    %78 = vector.broadcast %34 : f32 to vector<8x128xf32>
    %79 = arith.mulf %78, %23 : vector<8x128xf32>
    %80 = vector.broadcast %35 : f32 to vector<8x128xf32>
    %81 = arith.mulf %80, %25 : vector<8x128xf32>
    %82 = arith.addf %79, %81 : vector<8x128xf32>
    %83 = vector.broadcast %36 : f32 to vector<8x128xf32>
    %84 = arith.mulf %83, %27 : vector<8x128xf32>
    %85 = arith.addf %82, %84 : vector<8x128xf32>
    %86 = vector.broadcast %39 : f32 to vector<8x128xf32>
    %87 = arith.addf %85, %86 : vector<8x128xf32>
    %cst_12 = arith.constant 0.000000e+00 : f32
    %88 = vector.broadcast %cst_12 : f32 to vector<8x128xf32>
    %89 = arith.cmpf olt, %87, %88 : vector<8x128xf32>
    %90 = arith.andi %21, %89 : vector<8x128xi1>
    %91 = vector.broadcast %1 : f32 to vector<8x128xf32>
    %92 = arith.subf %87, %91 : vector<8x128xf32>
    %93 = vector.broadcast %1 : f32 to vector<8x128xf32>
    %94 = arith.addf %87, %93 : vector<8x128xf32>
    %95 = arith.select %90, %92, %94 : vector<8x128xi1>, vector<8x128xf32>
    %96 = arith.select %19, %95, %87 : vector<8x128xi1>, vector<8x128xf32>
    %c0_13 = arith.constant 0 : index
    %c0_14 = arith.constant 0 : index
    %c0_15 = arith.constant 0 : index
    %97 = vector.load %arg4[%c0_13, %c0_14, %c0_15] : memref<3x8x128xf32, #tpu.memory_space<vmem>>, vector<1x8x128xf32>
    %98 = vector.shape_cast %97 : vector<1x8x128xf32> to vector<8x128xf32>
    %99 = vector.shape_cast %58 : vector<8x128xf32> to vector<1x8x128xf32>
    tpu.vector_store %arg4[%c0_13, %c0_14, %c0_15], %99 {strides = array<i32>} : memref<3x8x128xf32, #tpu.memory_space<vmem>>, vector<1x8x128xf32>,
    %c1_16 = arith.constant 1 : index
    %c0_17 = arith.constant 0 : index
    %c0_18 = arith.constant 0 : index
    %100 = vector.load %arg4[%c1_16, %c0_17, %c0_18] : memref<3x8x128xf32, #tpu.memory_space<vmem>>, vector<1x8x128xf32>
    %101 = vector.shape_cast %100 : vector<1x8x128xf32> to vector<8x128xf32>
    %102 = vector.shape_cast %77 : vector<8x128xf32> to vector<1x8x128xf32>
    tpu.vector_store %arg4[%c1_16, %c0_17, %c0_18], %102 {strides = array<i32>} : memref<3x8x128xf32, #tpu.memory_space<vmem>>, vector<1x8x128xf32>,
    %cst_19 = arith.constant 0.000000e+00 : f32
    %103 = vector.broadcast %cst_19 : f32 to vector<8x128xf32>
    %104 = arith.subf %103, %96 : vector<8x128xf32>
    %c2_20 = arith.constant 2 : index
    %c0_21 = arith.constant 0 : index
    %c0_22 = arith.constant 0 : index
    %105 = vector.load %arg4[%c2_20, %c0_21, %c0_22] : memref<3x8x128xf32, #tpu.memory_space<vmem>>, vector<1x8x128xf32>
    %106 = vector.shape_cast %105 : vector<1x8x128xf32> to vector<8x128xf32>
    %107 = vector.shape_cast %104 : vector<8x128xf32> to vector<1x8x128xf32>
    tpu.vector_store %arg4[%c2_20, %c0_21, %c0_22], %107 {strides = array<i32>} : memref<3x8x128xf32, #tpu.memory_space<vmem>>, vector<1x8x128xf32>,
    %cst_23 = arith.constant 1.000000e+00 : f32
    %108 = vector.broadcast %cst_23 : f32 to vector<8x128xf32>
    %109 = arith.addf %96, %108 : vector<8x128xf32>
    %cst_24 = arith.constant 5.000000e-01 : f32
    %110 = vector.broadcast %cst_24 : f32 to vector<8x128xf32>
    %111 = arith.mulf %109, %110 : vector<8x128xf32>
    %c0_25 = arith.constant 0 : index
    %c0_26 = arith.constant 0 : index
    %112 = vector.load %arg5[%c0_25, %c0_26] : memref<8x128xf32, #tpu.memory_space<vmem>>, vector<8x128xf32>
    tpu.vector_store %arg5[%c0_25, %c0_26], %111 {strides = array<i32>} : memref<8x128xf32, #tpu.memory_space<vmem>>, vector<8x128xf32>,
    return
  }
  func.func @transform_0(%arg0: i32) -> i32 {
    %c0_i32 = arith.constant 0 : i32
    %c0_i32_0 = arith.constant 0 : i32
    return %c0_i32 : i32
  }
  func.func @transform_1(%arg0: i32) -> i32 {
    %c0_i32 = arith.constant 0 : i32
    %c0_i32_0 = arith.constant 0 : i32
    return %c0_i32 : i32
  }
  func.func @transform_2(%arg0: i32) -> (i32, i32, i32) {
    %c0_i32 = arith.constant 0 : i32
    %c0_i32_0 = arith.constant 0 : i32
    %c0_i32_1 = arith.constant 0 : i32
    return %c0_i32, %arg0, %c0_i32_0 : i32, i32, i32
  }
  func.func @transform_3(%arg0: i32) -> (i32, i32, i32) {
    %c0_i32 = arith.constant 0 : i32
    %c0_i32_0 = arith.constant 0 : i32
    %c0_i32_1 = arith.constant 0 : i32
    return %c0_i32, %arg0, %c0_i32_0 : i32, i32, i32
  }
  func.func @transform_4(%arg0: i32) -> (i32, i32) {
    %c0_i32 = arith.constant 0 : i32
    %c0_i32_0 = arith.constant 0 : i32
    return %arg0, %c0_i32 : i32, i32
  }
}

</mosaic_0001>

<llo_original>
// kernel: _forward_vertex_major.1
$region0: #{_forward_vertex_major.1}
  #allocation0 [shape = 'u32[]', space=smem, size = 0x4, offset = 0x4, fixed_abs, tag = 'smem constant byte address 0x4 - core index']
  #allocation1 [shape = 'u32[72,128]{1,0:T(1,128)}', space=vmem, size = 0x9000, scoped, tag = 'internal scratch']
  #allocation2 [shape = 's32[1]{0:T(128)S(6)}', space=smem, size = 0x200, scoped, tag = 'scoped memory for _forward_vertex_major.1']
  %s0 = inlined_call_operand.vmem [shape: f32[13], index: 0, kind: input, shape index: {}]
  %s1 = inlined_call_operand.<no memory space> [shape: s32[1], index: 1, kind: input, shape index: {}]
  %s2 = inlined_call_operand.hbm [shape: f32[3,8,128], index: 2, kind: input, shape index: {}]
  %s3 = inlined_call_operand.vmem [shape: f32[3,8,128], index: 3, kind: output, shape index: {0}]
  %s4 = inlined_call_operand.vmem [shape: f32[8,128], index: 4, kind: output, shape index: {1}]
  %5 = xla_tuple %s3, %s4
  %s6 = sld [smem:[#allocation0]]
  $region38: #{_forward_vertex_major.1} parent=0
    _
  %s8 = ssub.s32 1, %s6
  %s9 = scalar_select 0, %s8, %s6
  %10 = sst [smem:[#allocation2]] %s1
  $region1: #{_forward_vertex_major.1} parent=0
    #allocation3 [shape = 'u8[512]{0}', space=smem, size = 0x200, scoped, tag = 'input window, operand 0, single buffered']
    #allocation4 [shape = 's32[1]{0}', space=sflag, size = 0x4, scoped, tag = 'scoped memory for _forward_vertex_major.1']
    #allocation5 [shape = 's32[1]{0}', space=sflag, size = 0x4, scoped, tag = 'scoped memory for _forward_vertex_major.1']
    #allocation6 [shape = 'u8[12288]{0}', space=vmem, size = 0x3000, scoped, tag = 'input window, operand 2, single buffered']
    %11 = vsyncpa [#allocation5], 0
    %12 = vsyncpa [#allocation4], 0
    // Predicated region
    $region2: #{_forward_vertex_major.1} parent=1 // pred_check
      _
    $region3: #{_forward_vertex_major.1} parent=1 // pred_check_branch
      %14 = sbr.rel (0) target = $region5
    $region4: #{_forward_vertex_major.1} parent=1 // pred_region
      %16 = vsyncadd [#allocation5], 0
      %s18 = sshll.u32 %s0, 4
      %s19 = int_to_ptr.vmem [resolvable:$true] %s18
      %21 = dma.vmem_to_smem %s19, 16, [#allocation3], [#allocation5]
    $region5: #{_forward_vertex_major.1} parent=1 // pred_fallthru
      _
    // Predicated region
    $region6: #{_forward_vertex_major.1} parent=1 // pred_check
      _
    $region7: #{_forward_vertex_major.1} parent=1 // pred_check_branch
      %23 = sbr.rel (0) target = $region9
    $region8: #{_forward_vertex_major.1} parent=1 // pred_region
      _
    $region9: #{_forward_vertex_major.1} parent=1 // pred_fallthru
      _
    // Predicated region
    $region10: #{_forward_vertex_major.1} parent=1 // pred_check
      _
    $region11: #{_forward_vertex_major.1} parent=1 // pred_check_branch
      %25 = sbr.rel (0) target = $region13
    $region12: #{_forward_vertex_major.1} parent=1 // pred_region
      %27 = vsyncadd [#allocation4], 0
      %s28 = sshll.u32 %s2, 4
      %s29 = int_to_ptr.hbm [resolvable:$true] %s28
      %s30 = sshll.u32 [#allocation6], 4
      %s31 = int_to_ptr.vmem [resolvable:$true] %s30
      %36 = dma.hbm_to_vmem [thread:$0]  %s29, 384, %s31, [#allocation4], 128, 128, 8
    $region13: #{_forward_vertex_major.1} parent=1 // pred_fallthru
      _
    // Predicated region
    $region14: #{_forward_vertex_major.1} parent=1 // pred_check
      _
    $region15: #{_forward_vertex_major.1} parent=1 // pred_check_branch
      %38 = sbr.rel (0) target = $region17
    $region16: #{_forward_vertex_major.1} parent=1 // pred_region
      %40 = dma.done [#allocation5], 16
    $region17: #{_forward_vertex_major.1} parent=1 // pred_fallthru
      _
    // Predicated region
    $region18: #{_forward_vertex_major.1} parent=1 // pred_check
      _
    $region19: #{_forward_vertex_major.1} parent=1 // pred_check_branch
      %42 = sbr.rel (0) target = $region21
    $region20: #{_forward_vertex_major.1} parent=1 // pred_region
      %44 = dma.done [#allocation4], 384
    $region21: #{_forward_vertex_major.1} parent=1 // pred_fallthru
      _
    %45 = sfence
    %s46 = sld [smem:[#allocation2]]
    %s47 = sld [smem:[#allocation3 + $0xc]]
    %s48 = smul.u32 0, 1024
    %v49 = vlaneseq
    %v50 = vshrl.u32 %v49, 7
    %v51 = vlaneseq
    %v52 = vand.u32 %v51, 127
    %v53 = vmul.u32 %v50, 128
    %v54 = vstv %s48
    %v55 = vadd.s32 %v54, %v53
    %v56 = vadd.s32 %v55, %v52
    %v57 = vstv %s46
    %vm58 = vcmp.ge.s32.totalorder %v56, %v57
    %s59 = smul.u32 %s46, 2
    %v60 = vstv %s59
    %vm61 = vcmp.lt.s32.totalorder %v56, %v60
    %vm62 = vmand %vm58, %vm61
    %s63 = sadd.s32 %s46, 2
    %v64 = vstv %s63
    %vm65 = vcmp.ne.s32.totalorder %v56, %v64
    %vm66 = vmand %vm62, %vm65
    %vm67 = vcmp.eq.s32.totalorder %v56, %v57
    %v68 = vld [vmem:[#allocation6] sm:$0xff]
    %s69 = scalar_lea.vmem [#allocation6], 8
    %v70 = vld [vmem:[%s69] sm:$0xff]
    %s71 = scalar_lea.vmem [#allocation6], 16
    %v72 = vld [vmem:[%s71] sm:$0xff]
    %s73 = sld [smem:[#allocation3]]
    %s74 = sld [smem:[#allocation3 + $0x1]]
    %s75 = sld [smem:[#allocation3 + $0x2]]
    %s76 = sld [smem:[#allocation3 + $0x3]]
    %s77 = sld [smem:[#allocation3 + $0x4]]
    %s78 = sld [smem:[#allocation3 + $0x5]]
    %s79 = sld [smem:[#allocation3 + $0x6]]
    %s80 = sld [smem:[#allocation3 + $0x7]]
    %s81 = sld [smem:[#allocation3 + $0x8]]
    %s82 = sld [smem:[#allocation3 + $0x9]]
    %s83 = sld [smem:[#allocation3 + $0xa]]
    %s84 = sld [smem:[#allocation3 + $0xb]]
    %v85 = vstv %s73
    %v86 = vmul.f32 %v85, %v68
    %v87 = vstv %s74
    %v88 = vmul.f32 %v87, %v70
    %v89 = vadd.f32 %v86, %v88
    %v90 = vstv %s75
    %v91 = vmul.f32 %v90, %v72
    %v92 = vadd.f32 %v89, %v91
    %v93 = vstv %s82
    %v94 = vadd.f32 %v92, %v93
    %vm95 = vcmp.lt.f32.partialorder %v94, 0.0
    %vm96 = vmand %vm67, %vm95
    %v97 = vstv %s47
    %v98 = vsub.f32 %v94, %v97
    %v99 = vadd.f32 %v94, %v97
    %v100 = vsel %vm96, %v98, %v99
    %v101 = vsel %vm66, %v100, %v94
    %v102 = vstv %s76
    %v103 = vmul.f32 %v102, %v68
    %v104 = vstv %s77
    %v105 = vmul.f32 %v104, %v70
    %v106 = vadd.f32 %v103, %v105
    %v107 = vstv %s78
    %v108 = vmul.f32 %v107, %v72
    %v109 = vadd.f32 %v106, %v108
    %v110 = vstv %s83
    %v111 = vadd.f32 %v109, %v110
    %vm112 = vcmp.lt.f32.partialorder %v111, 0.0
    %vm113 = vmand %vm67, %vm112
    %v114 = vsub.f32 %v111, %v97
    %v115 = vadd.f32 %v111, %v97
    %v116 = vsel %vm113, %v114, %v115
    %v117 = vsel %vm66, %v116, %v111
    %v118 = vstv %s79
    %v119 = vmul.f32 %v118, %v68
    %v120 = vstv %s80
    %v121 = vmul.f32 %v120, %v70
    %v122 = vadd.f32 %v119, %v121
    %v123 = vstv %s81
    %v124 = vmul.f32 %v123, %v72
    %v125 = vadd.f32 %v122, %v124
    %v126 = vstv %s84
    %v127 = vadd.f32 %v125, %v126
    %vm128 = vcmp.lt.f32.partialorder %v127, 0.0
    %vm129 = vmand %vm67, %vm128
    %v130 = vsub.f32 %v127, %v97
    %v131 = vadd.f32 %v127, %v97
    %v132 = vsel %vm129, %v130, %v131
    %v133 = vsel %vm66, %v132, %v127
    %134 = vst [vmem:[%s3] sm:$0xff] %v101
    %s135 = scalar_lea.vmem %s3, 8
    %136 = vst [vmem:[%s135] sm:$0xff] %v117
    %v137 = vsub.f32 0.0, %v133
    %s138 = scalar_lea.vmem %s3, 16
    %139 = vst [vmem:[%s138] sm:$0xff] %v137
    %v140 = vadd.f32 %v133, 1.0
    %v141 = vmul.f32 %v140, 0.5
    %142 = vst [vmem:[%s4] sm:$0xff] %v141
    // Predicated region
    $region22: #{_forward_vertex_major.1} parent=1 // pred_check
      _
    $region23: #{_forward_vertex_major.1} parent=1 // pred_check_branch
      %144 = sbr.rel (0) target = $region25
    $region24: #{_forward_vertex_major.1} parent=1 // pred_region
      _
    $region25: #{_forward_vertex_major.1} parent=1 // pred_fallthru
      _
    // Predicated region
    $region26: #{_forward_vertex_major.1} parent=1 // pred_check
      _
    $region27: #{_forward_vertex_major.1} parent=1 // pred_check_branch
      %146 = sbr.rel (0) target = $region29
    $region28: #{_forward_vertex_major.1} parent=1 // pred_region
      _
    $region29: #{_forward_vertex_major.1} parent=1 // pred_fallthru
      _
    // Predicated region
    $region30: #{_forward_vertex_major.1} parent=1 // pred_check
      _
    $region31: #{_forward_vertex_major.1} parent=1 // pred_check_branch
      %148 = sbr.rel (0) target = $region33
    $region32: #{_forward_vertex_major.1} parent=1 // pred_region
      _
    $region33: #{_forward_vertex_major.1} parent=1 // pred_fallthru
      _
    // Predicated region
    $region34: #{_forward_vertex_major.1} parent=1 // pred_check
      _
    $region35: #{_forward_vertex_major.1} parent=1 // pred_check_branch
      %150 = sbr.rel (0) target = $region37
    $region36: #{_forward_vertex_major.1} parent=1 // pred_region
      _
    $region37: #{_forward_vertex_major.1} parent=1 // pred_fallthru
      _
    %151 = vsyncpa [#allocation4], 1
    %152 = vsyncpa [#allocation5], 1

</llo_original>
